<compile_context>
chip_gen: v7x
topology: tpu7x:2x2x1
jax: 0.10.0
libtpu: 0.0.40
codegen_flags: <defaults>
</compile_context>

<pallas_src>
import jax
import jax.numpy as jnp
from jax.experimental import pallas as pl
from jax.experimental.pallas import tpu as pltpu

_LANE_CANDIDATES = (1024, 512, 256, 128)
_TILE_BYTES = 8 * 1024 * 1024          # ~8 MiB input tile (per grid step)
_VMEM_LIMIT_BYTES = 48 * 1024 * 1024   # 4 x 8 MiB double-buffered in+out + headroom


def _scale_kernel(a_ref, x_ref, o_ref):
    # Cast the SMEM f32 scalar to the input dtype so the multiply stays in the
    # input dtype (matches PyTorch's weak scalar * tensor semantics for floats).
    a = a_ref[0, 0].astype(x_ref.dtype)
    o_ref[...] = (x_ref[...] * a).astype(o_ref.dtype)


def _round_up(v: int, m: int) -> int:
    return ((v + m - 1) // m) * m


def _choose_tile_rows(rows: int, lane: int, itemsize: int) -> int:
    """Byte-budgeted, sublane-pack aligned row tile; >=2 grid steps when possible."""
    pack = 8 * max(1, 4 // itemsize)          # 8 (f32) / 16 (bf16) / 32 (int8)
    budget_rows = max(pack, (_TILE_BYTES // (lane * itemsize)) // pack * pack)
    if rows > budget_rows:
        return budget_rows
    # Small/medium input: split into (at least) two blocks so v7x's second
    # TensorCore gets work; keep the block sublane-pack aligned. Falls back to
    # a single full-extent block (always legal) when the split can't stay packed.
    tile_r = _round_up(pl.cdiv(rows, 2), pack)
    if tile_r >= rows:
        return rows
    return tile_r


def scale(x: jax.Array, a: float) -> jax.Array:
    """Computes a * x elementwise via a Pallas TPU kernel (torch Scale.forward)."""
    # TODO(synk): integer inputs with fractional `a` truncate to the input dtype
    # here; PyTorch would promote to float. Floating dtypes match exactly.
    orig_shape = x.shape
    n = x.size
    if n == 0:
        return x

    itemsize = jnp.dtype(x.dtype).itemsize

    flat = x.reshape(-1)
    padded_n = _round_up(n, 128)              # pad only a truly ragged remainder
    if padded_n != n:
        flat = jnp.pad(flat, (0, padded_n - n))

    # Largest lane-dense width dividing the (possibly padded) length.
    lane = next(l for l in _LANE_CANDIDATES if padded_n % l == 0)
    rows = padded_n // lane
    x2d = flat.reshape(rows, lane)

    tile_r = _choose_tile_rows(rows, lane, itemsize)
    grid = (pl.cdiv(rows, tile_r),)

    a_arr = jnp.full((1, 1), a, dtype=jnp.float32)

    out2d = pl.pallas_call(
        _scale_kernel,
        out_shape=jax.ShapeDtypeStruct((rows, lane), x.dtype),
        grid=grid,
        in_specs=[
            pl.BlockSpec(memory_space=pltpu.MemorySpace.SMEM),   # scalar `a`
            pl.BlockSpec((tile_r, lane), lambda i: (i, 0)),
        ],
        out_specs=pl.BlockSpec((tile_r, lane), lambda i: (i, 0)),
        compiler_params=pltpu.CompilerParams(
            dimension_semantics=("parallel",),
            vmem_limit_bytes=_VMEM_LIMIT_BYTES,
        ),
    )(a_arr, x2d)

    out = out2d.reshape(-1)
    if padded_n != n:
        out = out[:n]
    return out.reshape(orig_shape)


if __name__ == "__main__":
    a = 2.5  # deterministic constructor argument Scale(a)

    # NCHW input, same convention as the PyTorch module would receive.
    x = jax.random.normal(jax.random.PRNGKey(0), (2, 4, 16, 16), dtype=jnp.float32)
    y = scale(x, a)
    jax.block_until_ready(y)
    assert y.shape == x.shape and y.dtype == x.dtype
    assert jnp.allclose(y, a * x, atol=1e-6, rtol=1e-6)

    # Ragged element count (exercises the minimal 128-pad path).
    x2 = jax.random.normal(jax.random.PRNGKey(1), (3, 5, 7), dtype=jnp.float32)
    y2 = scale(x2, a)
    jax.block_until_ready(y2)
    assert y2.shape == x2.shape and y2.dtype == x2.dtype
    assert jnp.allclose(y2, a * x2, atol=1e-6, rtol=1e-6)

    # bf16 path (multiply stays in bf16).
    x3 = jax.random.normal(jax.random.PRNGKey(2), (2, 8, 128), dtype=jnp.bfloat16)
    y3 = scale(x3, a)
    jax.block_until_ready(y3)
    assert y3.dtype == x3.dtype
    assert jnp.allclose(y3.astype(jnp.float32), a * x3.astype(jnp.float32),
                        atol=1e-2, rtol=1e-2)

    print("KERNEL_OK")
</pallas_src>

<mosaic_0001>
module attributes {stable_mosaic.version = 11 : i64} {
  func.func @_scale_kernel(%arg0: i32, %arg1: memref<1x1xf32, #tpu.memory_space<smem>>, %arg2: memref<2x1024xf32, #tpu.memory_space<vmem>>, %arg3: memref<2x1024xf32, #tpu.memory_space<vmem>>) attributes {dimension_semantics = [#tpu.dimension_semantics<parallel>], iteration_bounds = array<i64: 1>, scalar_prefetch = 0 : i64, scratch_operands = 0 : i64, tpu.core_type = #tpu.core_type<tc>, window_params = [{transform_indices = @transform_0, window_bounds = array<i64: 1, 1>}, {transform_indices = @transform_1, window_bounds = array<i64: 2, 1024>}, {transform_indices = @transform_2, window_bounds = array<i64: 2, 1024>}]} {
    %c0 = arith.constant 0 : index
    %c0_0 = arith.constant 0 : index
    %0 = memref.load %arg1[%c0, %c0_0] : memref<1x1xf32, #tpu.memory_space<smem>>
    %c0_1 = arith.constant 0 : index
    %c0_2 = arith.constant 0 : index
    %1 = vector.load %arg2[%c0_1, %c0_2] : memref<2x1024xf32, #tpu.memory_space<vmem>>, vector<2x1024xf32>
    %2 = vector.broadcast %0 : f32 to vector<2x1024xf32>
    %3 = arith.mulf %1, %2 : vector<2x1024xf32>
    %c0_3 = arith.constant 0 : index
    %c0_4 = arith.constant 0 : index
    %4 = vector.load %arg3[%c0_3, %c0_4] : memref<2x1024xf32, #tpu.memory_space<vmem>>, vector<2x1024xf32>
    tpu.vector_store %arg3[%c0_3, %c0_4], %3 {strides = array<i32>} : memref<2x1024xf32, #tpu.memory_space<vmem>>, vector<2x1024xf32>,
    return
  }
  func.func @transform_0(%arg0: i32) -> (i32, i32) {
    %c0_i32 = arith.constant 0 : i32
    %c0_i32_0 = arith.constant 0 : i32
    %c0_i32_1 = arith.constant 0 : i32
    return %c0_i32, %c0_i32_0 : i32, i32
  }
  func.func @transform_1(%arg0: i32) -> (i32, i32) {
    %c0_i32 = arith.constant 0 : i32
    %c0_i32_0 = arith.constant 0 : i32
    return %arg0, %c0_i32 : i32, i32
  }
  func.func @transform_2(%arg0: i32) -> (i32, i32) {
    %c0_i32 = arith.constant 0 : i32
    %c0_i32_0 = arith.constant 0 : i32
    return %arg0, %c0_i32 : i32, i32
  }
}

</mosaic_0001>

<llo_original>
// kernel: tpu_custom_call.1
$region0: #{tpu_custom_call.1}
  #allocation0 [shape = 'u32[]', space=smem, size = 0x4, offset = 0x4, fixed_abs, tag = 'smem constant byte address 0x4 - core index']
  #allocation1 [shape = 'u32[144,128]{1,0:T(1,128)}', space=vmem, size = 0x12000, scoped, tag = 'internal scratch']
  #allocation2 [shape = 'f32[1,1]{1,0:T(1,128)S(6)}', space=smem, size = 0x200, scoped, tag = 'scoped memory for tpu_custom_call.1']
  %s0 = inlined_call_operand.<no memory space> [shape: f32[1,1], index: 0, kind: input, shape index: {}]
  %s1 = inlined_call_operand.hbm [shape: f32[2,1024], index: 1, kind: input, shape index: {}]
  %s2 = inlined_call_operand.hbm [shape: f32[2,1024], index: 2, kind: output, shape index: {}]
  %s3 = sld [smem:[#allocation0]]
  $region22: #{tpu_custom_call.1} parent=0
    _
  %s5 = ssub.s32 1, %s3
  %s6 = scalar_select 0, %s5, %s3
  %7 = sst [smem:[#allocation2]] %s0
  $region1: #{tpu_custom_call.1} parent=0
    #allocation3 [shape = 'u8[8192]{0}', space=vmem, size = 0x2000, scoped, tag = 'input window, operand 1, single buffered']
    #allocation4 [shape = 's32[1]{0}', space=sflag, size = 0x4, scoped, tag = 'scoped memory for tpu_custom_call.1']
    #allocation5 [shape = 's32[1]{0}', space=sflag, size = 0x4, scoped, tag = 'scoped memory for tpu_custom_call.1']
    #allocation6 [shape = 'u8[8192]{0}', space=vmem, size = 0x2000, scoped, tag = 'output window, operand 0, single buffered']
    %8 = vsyncpa [#allocation4], 0
    %9 = vsyncpa [#allocation5], 0
    // Predicated region
    $region2: #{tpu_custom_call.1} parent=1 // pred_check
      _
    $region3: #{tpu_custom_call.1} parent=1 // pred_check_branch
      %11 = sbr.rel (0) target = $region5
    $region4: #{tpu_custom_call.1} parent=1 // pred_region
      _
    $region5: #{tpu_custom_call.1} parent=1 // pred_fallthru
      _
    // Predicated region
    $region6: #{tpu_custom_call.1} parent=1 // pred_check
      _
    $region7: #{tpu_custom_call.1} parent=1 // pred_check_branch
      %13 = sbr.rel (0) target = $region9
    $region8: #{tpu_custom_call.1} parent=1 // pred_region
      %s15 = ssub.s32 256, 256
      %16 = vsyncadd [#allocation4], %s15
      %s18 = sshll.u32 [#allocation3], 4
      %s19 = int_to_ptr.vmem [resolvable:$true] %s18
      %21 = dma.hbm_to_vmem [thread:$0]  %s1, 256, %s19, [#allocation4]
    $region9: #{tpu_custom_call.1} parent=1 // pred_fallthru
      _
    // Predicated region
    $region10: #{tpu_custom_call.1} parent=1 // pred_check
      _
    $region11: #{tpu_custom_call.1} parent=1 // pred_check_branch
      %23 = sbr.rel (0) target = $region13
    $region12: #{tpu_custom_call.1} parent=1 // pred_region
      %24 = dma.done [#allocation4], 256
    $region13: #{tpu_custom_call.1} parent=1 // pred_fallthru
      _
    %s25 = sld [smem:[#allocation2]]
    %v26 = vld [vmem:[#allocation3] sm:$0xff]
    %v27 = vld [vmem:[#allocation3 + $0x8] sm:$0xff]
    %v28 = vstv %s25
    %v29 = vmul.f32 %v26, %v28
    %v30 = vmul.f32 %v27, %v28
    %31 = vst [vmem:[#allocation6] sm:$0xff] %v29
    %32 = vst [vmem:[#allocation6 + $0x8] sm:$0xff] %v30
    // Predicated region
    $region14: #{tpu_custom_call.1} parent=1 // pred_check
      _
    $region15: #{tpu_custom_call.1} parent=1 // pred_check_branch
      %34 = sbr.rel (0) target = $region17
    $region16: #{tpu_custom_call.1} parent=1 // pred_region
      %s36 = ssub.s32 256, 256
      %37 = vsyncadd [#allocation5], %s36
      %s39 = sshll.u32 [#allocation6], 4
      %s40 = int_to_ptr.vmem [resolvable:$true] %s39
      %42 = dma.vmem_to_hbm [thread:$0]  %s40, 256, %s2, [#allocation5]
    $region17: #{tpu_custom_call.1} parent=1 // pred_fallthru
      _
    // Predicated region
    $region18: #{tpu_custom_call.1} parent=1 // pred_check
      _
    $region19: #{tpu_custom_call.1} parent=1 // pred_check_branch
      %44 = sbr.rel (0) target = $region21
    $region20: #{tpu_custom_call.1} parent=1 // pred_region
      %45 = dma.done [#allocation5], 256
    $region21: #{tpu_custom_call.1} parent=1 // pred_fallthru
      _
    %46 = vsyncpa [#allocation4], 1
    %47 = vsyncpa [#allocation5], 1

</llo_original>
